<compile_context>
chip_gen: v7x
topology: tpu7x:2x2x1
jax: 0.10.0
libtpu: 0.0.40
codegen_flags: <defaults>
</compile_context>

<pallas_src>
import jax
import jax.numpy as jnp
from jax.experimental import pallas as pl
from jax.experimental.pallas import tpu as pltpu


def gru_kernel(x_ref, wi_ref, wh_ref, bi_ref, bhp_ref, out_ref):
    T, B, F = x_ref.shape
    H3 = wh_ref.shape[1]
    H = H3 // 3

    # ---- Phase 0: fused input projection for all timesteps ------------------
    # No dependence on h -> off the sequential critical path.  One matmul with
    # a 96-lane result instead of three 32-lane ones.
    x2d = x_ref[...].reshape(T * B, F)
    gi = (jnp.dot(x2d, wi_ref[...], preferred_element_type=jnp.float32)
          + bi_ref[...]).reshape(T, B, H3)

    # Hoisted out of the loop (JAX does not CSE broadcasts across iterations).
    w_h = wh_ref[...]                                   # (H, 3H) packed r|z|n
    b_hp = jnp.broadcast_to(bhp_ref[...], (B, H3))      # [0 | 0 | b_hn]

    # ---- t = 0 specialized: h0 = 0 => h @ W_h = 0, gh_full = [0|0|b_hn] -----
    s0 = gi[0] + b_hp
    rz0 = jax.nn.sigmoid(s0[:, 0:2 * H])                # 64-lane sigmoid
    r0 = rz0[:, 0:H]
    z0 = rz0[:, H:2 * H]
    n0 = jnp.tanh(gi[0, :, 2 * H:] + r0 * b_hp[:, 2 * H:])
    h = (1.0 - z0) * n0                                 # + z0 * h0, h0 == 0
    out_ref[0] = h.astype(out_ref.dtype)

    # ---- Phase 1: sequential recurrence, fully unrolled (static T) ----------
    for t in range(1, T):
        # Single fused h-side matmul per step (the serialized critical path).
        gh = jnp.dot(h, w_h, preferred_element_type=jnp.float32) + b_hp  # (B, 3H)
        s = gi[t] + gh                                   # one 96-lane add
        rz = jax.nn.sigmoid(s[:, 0:2 * H])               # r|z args in lanes 0..2H
        r = rz[:, 0:H]
        z = rz[:, H:2 * H]
        n = jnp.tanh(gi[t, :, 2 * H:] + r * gh[:, 2 * H:])
        h = (1.0 - z) * n + z * h
        out_ref[t] = h.astype(out_ref.dtype)             # VMEM store; HBM DMA at end


def gru_encoder_forward(x, w_ih, w_hh, b_ih, b_hh):
    """x: (T, B, F) f32.  w_ih: (3H, F), w_hh: (3H, H), b_*: (3H,) (PyTorch layout,
    gate order r, z, n).  Returns rnn_out: (T, B, H) f32 (time-major)."""
    T, B, F = x.shape
    H = w_hh.shape[1]
    H3 = 3 * H

    # Pad batch to a multiple of 8 sublanes; padded rows evolve independently
    # through finite math (zeros -> sigmoid/tanh) and are sliced away at the end.
    B_pad = -(-B // 8) * 8
    if B_pad != B:
        x = jnp.pad(x, ((0, 0), (0, B_pad - B), (0, 0)))

    # Lane-packed weights: columns [W_*r | W_*z | W_*n].  PyTorch stores gates
    # as stacked rows, so a plain transpose gives exactly this packing.
    w_i = w_ih.T            # (F, 3H)
    w_h = w_hh.T            # (H, 3H)

    # Pre-summed biases: r/z gates take b_ih + b_hh; the n gate takes only
    # b_ih here -- its hidden-side bias b_hn must stay inside the r*(.) term,
    # so it is carried separately as a lane-padded [0 | 0 | b_hn] vector.
    b_i = jnp.concatenate(
        [b_ih[0:2 * H] + b_hh[0:2 * H], b_ih[2 * H:H3]]).reshape(1, H3)
    b_hp = jnp.concatenate(
        [jnp.zeros((2 * H,), jnp.float32), b_hh[2 * H:H3]]).reshape(1, H3)

    flops = 2 * T * B_pad * F * H3 + 2 * (T - 1) * B_pad * H * H3
    bytes_accessed = 4 * (T * B_pad * (F + H) + F * H3 + H * H3 + 2 * H3)

    out = pl.pallas_call(
        gru_kernel,
        out_shape=jax.ShapeDtypeStruct((T, B_pad, H), jnp.float32),
        grid_spec=pltpu.PrefetchScalarGridSpec(
            num_scalar_prefetch=0,
            # Single invocation: the time recurrence is unrolled in-kernel.
            # (v7x scaling: add a leading "parallel" batch-tile axis once B
            # grows; at B<=8 one core is correct and sufficient.)
            grid=(1,),
            in_specs=[
                pl.BlockSpec((T, B_pad, F), lambda i: (0, 0, 0)),  # X
                pl.BlockSpec((F, H3), lambda i: (0, 0)),           # W_i packed r|z|n
                pl.BlockSpec((H, H3), lambda i: (0, 0)),           # W_h packed r|z|n
                pl.BlockSpec((1, H3), lambda i: (0, 0)),           # b_i (+b_hh for r/z)
                pl.BlockSpec((1, H3), lambda i: (0, 0)),           # [0 | 0 | b_hn]
            ],
            out_specs=pl.BlockSpec((T, B_pad, H), lambda i: (0, 0, 0)),
        ),
        compiler_params=pltpu.CompilerParams(
            dimension_semantics=("arbitrary",),
        ),
        cost_estimate=pl.CostEstimate(
            flops=flops,
            transcendentals=3 * T * B_pad * H,
            bytes_accessed=bytes_accessed,
        ),
    )(x, w_i, w_h, b_i, b_hp)

    return out[:, :B, :]


def gru_reference(x, w_ih, w_hh, b_ih, b_hh):
    """Plain-JAX reference of PyTorch nn.GRU (single layer, h0=0), PyTorch layout."""
    T, B, F = x.shape
    H = w_hh.shape[1]

    def step(h, x_t):
        gi = x_t @ w_ih.T + b_ih
        gh = h @ w_hh.T + b_hh
        i_r, i_z, i_n = gi[:, :H], gi[:, H:2 * H], gi[:, 2 * H:]
        h_r, h_z, h_n = gh[:, :H], gh[:, H:2 * H], gh[:, 2 * H:]
        r = jax.nn.sigmoid(i_r + h_r)
        z = jax.nn.sigmoid(i_z + h_z)
        n = jnp.tanh(i_n + r * h_n)
        h_new = (1.0 - z) * n + z * h
        return h_new, h_new

    h0 = jnp.zeros((B, H), jnp.float32)
    _, outs = jax.lax.scan(step, h0, x)
    return outs


if __name__ == "__main__":
    # Small shapes consistent with the module: seq=8, batch=4, n_features=8, hidden=32
    T, B, F, H = 8, 4, 8, 32

    key = jax.random.PRNGKey(0)
    kx, k1, k2, k3, k4 = jax.random.split(key, 5)

    x = jax.random.normal(kx, (T, B, F), dtype=jnp.float32)

    # PyTorch GRU init: U(-1/sqrt(H), 1/sqrt(H)), PyTorch weight layout.
    bound = 1.0 / (H ** 0.5)
    w_ih = jax.random.uniform(k1, (3 * H, F), jnp.float32, -bound, bound)
    w_hh = jax.random.uniform(k2, (3 * H, H), jnp.float32, -bound, bound)
    b_ih = jax.random.uniform(k3, (3 * H,), jnp.float32, -bound, bound)
    b_hh = jax.random.uniform(k4, (3 * H,), jnp.float32, -bound, bound)

    rnn_out = gru_encoder_forward(x, w_ih, w_hh, b_ih, b_hh)
    jax.block_until_ready(rnn_out)

    ref = gru_reference(x, w_ih, w_hh, b_ih, b_hh)
    assert rnn_out.shape == (T, B, H)
    assert jnp.allclose(rnn_out, ref, atol=1e-5, rtol=1e-5), "mismatch vs reference"

    print("KERNEL_OK")
</pallas_src>

<mosaic_0001>
module attributes {stable_mosaic.version = 11 : i64} {
  func.func @gru_kernel(%arg0: i32, %arg1: memref<8x8x8xf32, #tpu.memory_space<vmem>>, %arg2: memref<8x96xf32, #tpu.memory_space<vmem>>, %arg3: memref<32x96xf32, #tpu.memory_space<vmem>>, %arg4: memref<1x96xf32, #tpu.memory_space<vmem>>, %arg5: memref<1x96xf32, #tpu.memory_space<vmem>>, %arg6: memref<8x8x32xf32, #tpu.memory_space<vmem>>) attributes {dimension_semantics = [#tpu.dimension_semantics<arbitrary>], iteration_bounds = array<i64: 1>, scalar_prefetch = 0 : i64, scratch_operands = 0 : i64, tpu.core_type = #tpu.core_type<tc>, window_params = [{pipeline_mode = #tpu.pipeline_mode<synchronous>, transform_indices = @transform_0, window_bounds = array<i64: 8, 8, 8>}, {pipeline_mode = #tpu.pipeline_mode<synchronous>, transform_indices = @transform_1, window_bounds = array<i64: 8, 96>}, {pipeline_mode = #tpu.pipeline_mode<synchronous>, transform_indices = @transform_2, window_bounds = array<i64: 32, 96>}, {pipeline_mode = #tpu.pipeline_mode<synchronous>, transform_indices = @transform_3, window_bounds = array<i64: 1, 96>}, {pipeline_mode = #tpu.pipeline_mode<synchronous>, transform_indices = @transform_4, window_bounds = array<i64: 1, 96>}, {pipeline_mode = #tpu.pipeline_mode<synchronous>, transform_indices = @transform_5, window_bounds = array<i64: 8, 8, 32>}]} {
    %c0 = arith.constant 0 : index
    %c0_0 = arith.constant 0 : index
    %c0_1 = arith.constant 0 : index
    %0 = vector.load %arg1[%c0, %c0_0, %c0_1] : memref<8x8x8xf32, #tpu.memory_space<vmem>>, vector<8x8x8xf32>
    %1 = vector.shape_cast %0 : vector<8x8x8xf32> to vector<64x8xf32>
    %c0_2 = arith.constant 0 : index
    %c0_3 = arith.constant 0 : index
    %2 = vector.load %arg2[%c0_2, %c0_3] : memref<8x96xf32, #tpu.memory_space<vmem>>, vector<8x96xf32>
    %cst = arith.constant dense<0.000000e+00> : vector<64x96xf32>
    %3 = tpu.matmul %1, %2, %cst {dimension_numbers = #tpu.dot_dimension_numbers<[1], [0], [0], [1], [0, 0, 1, 1], [], []>} : vector<64x8xf32>, vector<8x96xf32>, vector<64x96xf32> -> vector<64x96xf32>
    %c0_4 = arith.constant 0 : index
    %c0_5 = arith.constant 0 : index
    %4 = vector.load %arg4[%c0_4, %c0_5] : memref<1x96xf32, #tpu.memory_space<vmem>>, vector<1x96xf32>
    %5 = vector.broadcast %4 : vector<1x96xf32> to vector<64x96xf32>
    %6 = arith.addf %3, %5 : vector<64x96xf32>
    %7 = vector.shape_cast %6 : vector<64x96xf32> to vector<8x8x96xf32>
    %c0_6 = arith.constant 0 : index
    %c0_7 = arith.constant 0 : index
    %8 = vector.load %arg3[%c0_6, %c0_7] : memref<32x96xf32, #tpu.memory_space<vmem>>, vector<32x96xf32>
    %c0_8 = arith.constant 0 : index
    %c0_9 = arith.constant 0 : index
    %9 = vector.load %arg5[%c0_8, %c0_9] : memref<1x96xf32, #tpu.memory_space<vmem>>, vector<1x96xf32>
    %10 = vector.shape_cast %9 : vector<1x96xf32> to vector<1x96xf32>
    %11 = vector.broadcast %10 : vector<1x96xf32> to vector<8x96xf32>
    %12 = vector.extract_strided_slice %7 {offsets = [0, 0, 0], sizes = [1, 8, 96], strides = [1, 1, 1]} : vector<8x8x96xf32> to vector<1x8x96xf32>
    %13 = vector.shape_cast %12 : vector<1x8x96xf32> to vector<8x96xf32>
    %14 = arith.addf %13, %11 : vector<8x96xf32>
    %15 = vector.extract_strided_slice %14 {offsets = [0, 0], sizes = [8, 64], strides = [1, 1]} : vector<8x96xf32> to vector<8x64xf32>
    %16 = arith.negf %15 : vector<8x64xf32>
    %17 = math.exp %16 : vector<8x64xf32>
    %cst_10 = arith.constant 1.000000e+00 : f32
    %18 = vector.broadcast %cst_10 : f32 to vector<8x64xf32>
    %19 = arith.addf %18, %17 : vector<8x64xf32>
    %20 = arith.divf %18, %19 : vector<8x64xf32>
    %21 = vector.extract_strided_slice %20 {offsets = [0, 0], sizes = [8, 32], strides = [1, 1]} : vector<8x64xf32> to vector<8x32xf32>
    %22 = vector.extract_strided_slice %20 {offsets = [0, 32], sizes = [8, 32], strides = [1, 1]} : vector<8x64xf32> to vector<8x32xf32>
    %23 = vector.extract_strided_slice %7 {offsets = [0, 0, 64], sizes = [1, 8, 32], strides = [1, 1, 1]} : vector<8x8x96xf32> to vector<1x8x32xf32>
    %24 = vector.shape_cast %23 : vector<1x8x32xf32> to vector<8x32xf32>
    %25 = vector.extract_strided_slice %11 {offsets = [0, 64], sizes = [8, 32], strides = [1, 1]} : vector<8x96xf32> to vector<8x32xf32>
    %26 = arith.mulf %21, %25 : vector<8x32xf32>
    %27 = arith.addf %24, %26 : vector<8x32xf32>
    %28 = math.tanh %27 : vector<8x32xf32>
    %cst_11 = arith.constant 1.000000e+00 : f32
    %29 = vector.broadcast %cst_11 : f32 to vector<8x32xf32>
    %30 = arith.subf %29, %22 : vector<8x32xf32>
    %31 = arith.mulf %30, %28 : vector<8x32xf32>
    %c0_12 = arith.constant 0 : index
    %c0_13 = arith.constant 0 : index
    %c0_14 = arith.constant 0 : index
    %32 = vector.load %arg6[%c0_12, %c0_13, %c0_14] : memref<8x8x32xf32, #tpu.memory_space<vmem>>, vector<1x8x32xf32>
    %33 = vector.shape_cast %32 : vector<1x8x32xf32> to vector<8x32xf32>
    %34 = vector.shape_cast %31 : vector<8x32xf32> to vector<1x8x32xf32>
    tpu.vector_store %arg6[%c0_12, %c0_13, %c0_14], %34 {strides = array<i32>} : memref<8x8x32xf32, #tpu.memory_space<vmem>>, vector<1x8x32xf32>,
    %cst_15 = arith.constant dense<0.000000e+00> : vector<8x96xf32>
    %35 = tpu.matmul %31, %8, %cst_15 {dimension_numbers = #tpu.dot_dimension_numbers<[1], [0], [0], [1], [0, 0, 1, 1], [], []>} : vector<8x32xf32>, vector<32x96xf32>, vector<8x96xf32> -> vector<8x96xf32>
    %36 = arith.addf %35, %11 : vector<8x96xf32>
    %37 = vector.extract_strided_slice %7 {offsets = [1, 0, 0], sizes = [1, 8, 96], strides = [1, 1, 1]} : vector<8x8x96xf32> to vector<1x8x96xf32>
    %38 = vector.shape_cast %37 : vector<1x8x96xf32> to vector<8x96xf32>
    %39 = arith.addf %38, %36 : vector<8x96xf32>
    %40 = vector.extract_strided_slice %39 {offsets = [0, 0], sizes = [8, 64], strides = [1, 1]} : vector<8x96xf32> to vector<8x64xf32>
    %41 = arith.negf %40 : vector<8x64xf32>
    %42 = math.exp %41 : vector<8x64xf32>
    %cst_16 = arith.constant 1.000000e+00 : f32
    %43 = vector.broadcast %cst_16 : f32 to vector<8x64xf32>
    %44 = arith.addf %43, %42 : vector<8x64xf32>
    %45 = arith.divf %43, %44 : vector<8x64xf32>
    %46 = vector.extract_strided_slice %45 {offsets = [0, 0], sizes = [8, 32], strides = [1, 1]} : vector<8x64xf32> to vector<8x32xf32>
    %47 = vector.extract_strided_slice %45 {offsets = [0, 32], sizes = [8, 32], strides = [1, 1]} : vector<8x64xf32> to vector<8x32xf32>
    %48 = vector.extract_strided_slice %7 {offsets = [1, 0, 64], sizes = [1, 8, 32], strides = [1, 1, 1]} : vector<8x8x96xf32> to vector<1x8x32xf32>
    %49 = vector.shape_cast %48 : vector<1x8x32xf32> to vector<8x32xf32>
    %50 = vector.extract_strided_slice %36 {offsets = [0, 64], sizes = [8, 32], strides = [1, 1]} : vector<8x96xf32> to vector<8x32xf32>
    %51 = arith.mulf %46, %50 : vector<8x32xf32>
    %52 = arith.addf %49, %51 : vector<8x32xf32>
    %53 = math.tanh %52 : vector<8x32xf32>
    %cst_17 = arith.constant 1.000000e+00 : f32
    %54 = vector.broadcast %cst_17 : f32 to vector<8x32xf32>
    %55 = arith.subf %54, %47 : vector<8x32xf32>
    %56 = arith.mulf %55, %53 : vector<8x32xf32>
    %57 = arith.mulf %47, %31 : vector<8x32xf32>
    %58 = arith.addf %56, %57 : vector<8x32xf32>
    %c1 = arith.constant 1 : index
    %c0_18 = arith.constant 0 : index
    %c0_19 = arith.constant 0 : index
    %59 = vector.load %arg6[%c1, %c0_18, %c0_19] : memref<8x8x32xf32, #tpu.memory_space<vmem>>, vector<1x8x32xf32>
    %60 = vector.shape_cast %59 : vector<1x8x32xf32> to vector<8x32xf32>
    %61 = vector.shape_cast %58 : vector<8x32xf32> to vector<1x8x32xf32>
    tpu.vector_store %arg6[%c1, %c0_18, %c0_19], %61 {strides = array<i32>} : memref<8x8x32xf32, #tpu.memory_space<vmem>>, vector<1x8x32xf32>,
    %cst_20 = arith.constant dense<0.000000e+00> : vector<8x96xf32>
    %62 = tpu.matmul %58, %8, %cst_20 {dimension_numbers = #tpu.dot_dimension_numbers<[1], [0], [0], [1], [0, 0, 1, 1], [], []>} : vector<8x32xf32>, vector<32x96xf32>, vector<8x96xf32> -> vector<8x96xf32>
    %63 = arith.addf %62, %11 : vector<8x96xf32>
    %64 = vector.extract_strided_slice %7 {offsets = [2, 0, 0], sizes = [1, 8, 96], strides = [1, 1, 1]} : vector<8x8x96xf32> to vector<1x8x96xf32>
    %65 = vector.shape_cast %64 : vector<1x8x96xf32> to vector<8x96xf32>
    %66 = arith.addf %65, %63 : vector<8x96xf32>
    %67 = vector.extract_strided_slice %66 {offsets = [0, 0], sizes = [8, 64], strides = [1, 1]} : vector<8x96xf32> to vector<8x64xf32>
    %68 = arith.negf %67 : vector<8x64xf32>
    %69 = math.exp %68 : vector<8x64xf32>
    %cst_21 = arith.constant 1.000000e+00 : f32
    %70 = vector.broadcast %cst_21 : f32 to vector<8x64xf32>
    %71 = arith.addf %70, %69 : vector<8x64xf32>
    %72 = arith.divf %70, %71 : vector<8x64xf32>
    %73 = vector.extract_strided_slice %72 {offsets = [0, 0], sizes = [8, 32], strides = [1, 1]} : vector<8x64xf32> to vector<8x32xf32>
    %74 = vector.extract_strided_slice %72 {offsets = [0, 32], sizes = [8, 32], strides = [1, 1]} : vector<8x64xf32> to vector<8x32xf32>
    %75 = vector.extract_strided_slice %7 {offsets = [2, 0, 64], sizes = [1, 8, 32], strides = [1, 1, 1]} : vector<8x8x96xf32> to vector<1x8x32xf32>
    %76 = vector.shape_cast %75 : vector<1x8x32xf32> to vector<8x32xf32>
    %77 = vector.extract_strided_slice %63 {offsets = [0, 64], sizes = [8, 32], strides = [1, 1]} : vector<8x96xf32> to vector<8x32xf32>
    %78 = arith.mulf %73, %77 : vector<8x32xf32>
    %79 = arith.addf %76, %78 : vector<8x32xf32>
    %80 = math.tanh %79 : vector<8x32xf32>
    %cst_22 = arith.constant 1.000000e+00 : f32
    %81 = vector.broadcast %cst_22 : f32 to vector<8x32xf32>
    %82 = arith.subf %81, %74 : vector<8x32xf32>
    %83 = arith.mulf %82, %80 : vector<8x32xf32>
    %84 = arith.mulf %74, %58 : vector<8x32xf32>
    %85 = arith.addf %83, %84 : vector<8x32xf32>
    %c2 = arith.constant 2 : index
    %c0_23 = arith.constant 0 : index
    %c0_24 = arith.constant 0 : index
    %86 = vector.load %arg6[%c2, %c0_23, %c0_24] : memref<8x8x32xf32, #tpu.memory_space<vmem>>, vector<1x8x32xf32>
    %87 = vector.shape_cast %86 : vector<1x8x32xf32> to vector<8x32xf32>
    %88 = vector.shape_cast %85 : vector<8x32xf32> to vector<1x8x32xf32>
    tpu.vector_store %arg6[%c2, %c0_23, %c0_24], %88 {strides = array<i32>} : memref<8x8x32xf32, #tpu.memory_space<vmem>>, vector<1x8x32xf32>,
    %cst_25 = arith.constant dense<0.000000e+00> : vector<8x96xf32>
    %89 = tpu.matmul %85, %8, %cst_25 {dimension_numbers = #tpu.dot_dimension_numbers<[1], [0], [0], [1], [0, 0, 1, 1], [], []>} : vector<8x32xf32>, vector<32x96xf32>, vector<8x96xf32> -> vector<8x96xf32>
    %90 = arith.addf %89, %11 : vector<8x96xf32>
    %91 = vector.extract_strided_slice %7 {offsets = [3, 0, 0], sizes = [1, 8, 96], strides = [1, 1, 1]} : vector<8x8x96xf32> to vector<1x8x96xf32>
    %92 = vector.shape_cast %91 : vector<1x8x96xf32> to vector<8x96xf32>
    %93 = arith.addf %92, %90 : vector<8x96xf32>
    %94 = vector.extract_strided_slice %93 {offsets = [0, 0], sizes = [8, 64], strides = [1, 1]} : vector<8x96xf32> to vector<8x64xf32>
    %95 = arith.negf %94 : vector<8x64xf32>
    %96 = math.exp %95 : vector<8x64xf32>
    %cst_26 = arith.constant 1.000000e+00 : f32
    %97 = vector.broadcast %cst_26 : f32 to vector<8x64xf32>
    %98 = arith.addf %97, %96 : vector<8x64xf32>
    %99 = arith.divf %97, %98 : vector<8x64xf32>
    %100 = vector.extract_strided_slice %99 {offsets = [0, 0], sizes = [8, 32], strides = [1, 1]} : vector<8x64xf32> to vector<8x32xf32>
    %101 = vector.extract_strided_slice %99 {offsets = [0, 32], sizes = [8, 32], strides = [1, 1]} : vector<8x64xf32> to vector<8x32xf32>
    %102 = vector.extract_strided_slice %7 {offsets = [3, 0, 64], sizes = [1, 8, 32], strides = [1, 1, 1]} : vector<8x8x96xf32> to vector<1x8x32xf32>
    %103 = vector.shape_cast %102 : vector<1x8x32xf32> to vector<8x32xf32>
    %104 = vector.extract_strided_slice %90 {offsets = [0, 64], sizes = [8, 32], strides = [1, 1]} : vector<8x96xf32> to vector<8x32xf32>
    %105 = arith.mulf %100, %104 : vector<8x32xf32>
    %106 = arith.addf %103, %105 : vector<8x32xf32>
    %107 = math.tanh %106 : vector<8x32xf32>
    %cst_27 = arith.constant 1.000000e+00 : f32
    %108 = vector.broadcast %cst_27 : f32 to vector<8x32xf32>
    %109 = arith.subf %108, %101 : vector<8x32xf32>
    %110 = arith.mulf %109, %107 : vector<8x32xf32>
    %111 = arith.mulf %101, %85 : vector<8x32xf32>
    %112 = arith.addf %110, %111 : vector<8x32xf32>
    %c3 = arith.constant 3 : index
    %c0_28 = arith.constant 0 : index
    %c0_29 = arith.constant 0 : index
    %113 = vector.load %arg6[%c3, %c0_28, %c0_29] : memref<8x8x32xf32, #tpu.memory_space<vmem>>, vector<1x8x32xf32>
    %114 = vector.shape_cast %113 : vector<1x8x32xf32> to vector<8x32xf32>
    %115 = vector.shape_cast %112 : vector<8x32xf32> to vector<1x8x32xf32>
    tpu.vector_store %arg6[%c3, %c0_28, %c0_29], %115 {strides = array<i32>} : memref<8x8x32xf32, #tpu.memory_space<vmem>>, vector<1x8x32xf32>,
    %cst_30 = arith.constant dense<0.000000e+00> : vector<8x96xf32>
    %116 = tpu.matmul %112, %8, %cst_30 {dimension_numbers = #tpu.dot_dimension_numbers<[1], [0], [0], [1], [0, 0, 1, 1], [], []>} : vector<8x32xf32>, vector<32x96xf32>, vector<8x96xf32> -> vector<8x96xf32>
    %117 = arith.addf %116, %11 : vector<8x96xf32>
    %118 = vector.extract_strided_slice %7 {offsets = [4, 0, 0], sizes = [1, 8, 96], strides = [1, 1, 1]} : vector<8x8x96xf32> to vector<1x8x96xf32>
    %119 = vector.shape_cast %118 : vector<1x8x96xf32> to vector<8x96xf32>
    %120 = arith.addf %119, %117 : vector<8x96xf32>
    %121 = vector.extract_strided_slice %120 {offsets = [0, 0], sizes = [8, 64], strides = [1, 1]} : vector<8x96xf32> to vector<8x64xf32>
    %122 = arith.negf %121 : vector<8x64xf32>
    %123 = math.exp %122 : vector<8x64xf32>
    %cst_31 = arith.constant 1.000000e+00 : f32
    %124 = vector.broadcast %cst_31 : f32 to vector<8x64xf32>
    %125 = arith.addf %124, %123 : vector<8x64xf32>
    %126 = arith.divf %124, %125 : vector<8x64xf32>
    %127 = vector.extract_strided_slice %126 {offsets = [0, 0], sizes = [8, 32], strides = [1, 1]} : vector<8x64xf32> to vector<8x32xf32>
    %128 = vector.extract_strided_slice %126 {offsets = [0, 32], sizes = [8, 32], strides = [1, 1]} : vector<8x64xf32> to vector<8x32xf32>
    %129 = vector.extract_strided_slice %7 {offsets = [4, 0, 64], sizes = [1, 8, 32], strides = [1, 1, 1]} : vector<8x8x96xf32> to vector<1x8x32xf32>
    %130 = vector.shape_cast %129 : vector<1x8x32xf32> to vector<8x32xf32>
    %131 = vector.extract_strided_slice %117 {offsets = [0, 64], sizes = [8, 32], strides = [1, 1]} : vector<8x96xf32> to vector<8x32xf32>
    %132 = arith.mulf %127, %131 : vector<8x32xf32>
    %133 = arith.addf %130, %132 : vector<8x32xf32>
    %134 = math.tanh %133 : vector<8x32xf32>
    %cst_32 = arith.constant 1.000000e+00 : f32
    %135 = vector.broadcast %cst_32 : f32 to vector<8x32xf32>
    %136 = arith.subf %135, %128 : vector<8x32xf32>
    %137 = arith.mulf %136, %134 : vector<8x32xf32>
    %138 = arith.mulf %128, %112 : vector<8x32xf32>
    %139 = arith.addf %137, %138 : vector<8x32xf32>
    %c4 = arith.constant 4 : index
    %c0_33 = arith.constant 0 : index
    %c0_34 = arith.constant 0 : index
    %140 = vector.load %arg6[%c4, %c0_33, %c0_34] : memref<8x8x32xf32, #tpu.memory_space<vmem>>, vector<1x8x32xf32>
    %141 = vector.shape_cast %140 : vector<1x8x32xf32> to vector<8x32xf32>
    %142 = vector.shape_cast %139 : vector<8x32xf32> to vector<1x8x32xf32>
    tpu.vector_store %arg6[%c4, %c0_33, %c0_34], %142 {strides = array<i32>} : memref<8x8x32xf32, #tpu.memory_space<vmem>>, vector<1x8x32xf32>,
    %cst_35 = arith.constant dense<0.000000e+00> : vector<8x96xf32>
    %143 = tpu.matmul %139, %8, %cst_35 {dimension_numbers = #tpu.dot_dimension_numbers<[1], [0], [0], [1], [0, 0, 1, 1], [], []>} : vector<8x32xf32>, vector<32x96xf32>, vector<8x96xf32> -> vector<8x96xf32>
    %144 = arith.addf %143, %11 : vector<8x96xf32>
    %145 = vector.extract_strided_slice %7 {offsets = [5, 0, 0], sizes = [1, 8, 96], strides = [1, 1, 1]} : vector<8x8x96xf32> to vector<1x8x96xf32>
    %146 = vector.shape_cast %145 : vector<1x8x96xf32> to vector<8x96xf32>
    %147 = arith.addf %146, %144 : vector<8x96xf32>
    %148 = vector.extract_strided_slice %147 {offsets = [0, 0], sizes = [8, 64], strides = [1, 1]} : vector<8x96xf32> to vector<8x64xf32>
    %149 = arith.negf %148 : vector<8x64xf32>
    %150 = math.exp %149 : vector<8x64xf32>
    %cst_36 = arith.constant 1.000000e+00 : f32
    %151 = vector.broadcast %cst_36 : f32 to vector<8x64xf32>
    %152 = arith.addf %151, %150 : vector<8x64xf32>
    %153 = arith.divf %151, %152 : vector<8x64xf32>
    %154 = vector.extract_strided_slice %153 {offsets = [0, 0], sizes = [8, 32], strides = [1, 1]} : vector<8x64xf32> to vector<8x32xf32>
    %155 = vector.extract_strided_slice %153 {offsets = [0, 32], sizes = [8, 32], strides = [1, 1]} : vector<8x64xf32> to vector<8x32xf32>
    %156 = vector.extract_strided_slice %7 {offsets = [5, 0, 64], sizes = [1, 8, 32], strides = [1, 1, 1]} : vector<8x8x96xf32> to vector<1x8x32xf32>
    %157 = vector.shape_cast %156 : vector<1x8x32xf32> to vector<8x32xf32>
    %158 = vector.extract_strided_slice %144 {offsets = [0, 64], sizes = [8, 32], strides = [1, 1]} : vector<8x96xf32> to vector<8x32xf32>
    %159 = arith.mulf %154, %158 : vector<8x32xf32>
    %160 = arith.addf %157, %159 : vector<8x32xf32>
    %161 = math.tanh %160 : vector<8x32xf32>
    %cst_37 = arith.constant 1.000000e+00 : f32
    %162 = vector.broadcast %cst_37 : f32 to vector<8x32xf32>
    %163 = arith.subf %162, %155 : vector<8x32xf32>
    %164 = arith.mulf %163, %161 : vector<8x32xf32>
    %165 = arith.mulf %155, %139 : vector<8x32xf32>
    %166 = arith.addf %164, %165 : vector<8x32xf32>
    %c5 = arith.constant 5 : index
    %c0_38 = arith.constant 0 : index
    %c0_39 = arith.constant 0 : index
    %167 = vector.load %arg6[%c5, %c0_38, %c0_39] : memref<8x8x32xf32, #tpu.memory_space<vmem>>, vector<1x8x32xf32>
    %168 = vector.shape_cast %167 : vector<1x8x32xf32> to vector<8x32xf32>
    %169 = vector.shape_cast %166 : vector<8x32xf32> to vector<1x8x32xf32>
    tpu.vector_store %arg6[%c5, %c0_38, %c0_39], %169 {strides = array<i32>} : memref<8x8x32xf32, #tpu.memory_space<vmem>>, vector<1x8x32xf32>,
    %cst_40 = arith.constant dense<0.000000e+00> : vector<8x96xf32>
    %170 = tpu.matmul %166, %8, %cst_40 {dimension_numbers = #tpu.dot_dimension_numbers<[1], [0], [0], [1], [0, 0, 1, 1], [], []>} : vector<8x32xf32>, vector<32x96xf32>, vector<8x96xf32> -> vector<8x96xf32>
    %171 = arith.addf %170, %11 : vector<8x96xf32>
    %172 = vector.extract_strided_slice %7 {offsets = [6, 0, 0], sizes = [1, 8, 96], strides = [1, 1, 1]} : vector<8x8x96xf32> to vector<1x8x96xf32>
    %173 = vector.shape_cast %172 : vector<1x8x96xf32> to vector<8x96xf32>
    %174 = arith.addf %173, %171 : vector<8x96xf32>
    %175 = vector.extract_strided_slice %174 {offsets = [0, 0], sizes = [8, 64], strides = [1, 1]} : vector<8x96xf32> to vector<8x64xf32>
    %176 = arith.negf %175 : vector<8x64xf32>
    %177 = math.exp %176 : vector<8x64xf32>
    %cst_41 = arith.constant 1.000000e+00 : f32
    %178 = vector.broadcast %cst_41 : f32 to vector<8x64xf32>
    %179 = arith.addf %178, %177 : vector<8x64xf32>
    %180 = arith.divf %178, %179 : vector<8x64xf32>
    %181 = vector.extract_strided_slice %180 {offsets = [0, 0], sizes = [8, 32], strides = [1, 1]} : vector<8x64xf32> to vector<8x32xf32>
    %182 = vector.extract_strided_slice %180 {offsets = [0, 32], sizes = [8, 32], strides = [1, 1]} : vector<8x64xf32> to vector<8x32xf32>
    %183 = vector.extract_strided_slice %7 {offsets = [6, 0, 64], sizes = [1, 8, 32], strides = [1, 1, 1]} : vector<8x8x96xf32> to vector<1x8x32xf32>
    %184 = vector.shape_cast %183 : vector<1x8x32xf32> to vector<8x32xf32>
    %185 = vector.extract_strided_slice %171 {offsets = [0, 64], sizes = [8, 32], strides = [1, 1]} : vector<8x96xf32> to vector<8x32xf32>
    %186 = arith.mulf %181, %185 : vector<8x32xf32>
    %187 = arith.addf %184, %186 : vector<8x32xf32>
    %188 = math.tanh %187 : vector<8x32xf32>
    %cst_42 = arith.constant 1.000000e+00 : f32
    %189 = vector.broadcast %cst_42 : f32 to vector<8x32xf32>
    %190 = arith.subf %189, %182 : vector<8x32xf32>
    %191 = arith.mulf %190, %188 : vector<8x32xf32>
    %192 = arith.mulf %182, %166 : vector<8x32xf32>
    %193 = arith.addf %191, %192 : vector<8x32xf32>
    %c6 = arith.constant 6 : index
    %c0_43 = arith.constant 0 : index
    %c0_44 = arith.constant 0 : index
    %194 = vector.load %arg6[%c6, %c0_43, %c0_44] : memref<8x8x32xf32, #tpu.memory_space<vmem>>, vector<1x8x32xf32>
    %195 = vector.shape_cast %194 : vector<1x8x32xf32> to vector<8x32xf32>
    %196 = vector.shape_cast %193 : vector<8x32xf32> to vector<1x8x32xf32>
    tpu.vector_store %arg6[%c6, %c0_43, %c0_44], %196 {strides = array<i32>} : memref<8x8x32xf32, #tpu.memory_space<vmem>>, vector<1x8x32xf32>,
    %cst_45 = arith.constant dense<0.000000e+00> : vector<8x96xf32>
    %197 = tpu.matmul %193, %8, %cst_45 {dimension_numbers = #tpu.dot_dimension_numbers<[1], [0], [0], [1], [0, 0, 1, 1], [], []>} : vector<8x32xf32>, vector<32x96xf32>, vector<8x96xf32> -> vector<8x96xf32>
    %198 = arith.addf %197, %11 : vector<8x96xf32>
    %199 = vector.extract_strided_slice %7 {offsets = [7, 0, 0], sizes = [1, 8, 96], strides = [1, 1, 1]} : vector<8x8x96xf32> to vector<1x8x96xf32>
    %200 = vector.shape_cast %199 : vector<1x8x96xf32> to vector<8x96xf32>
    %201 = arith.addf %200, %198 : vector<8x96xf32>
    %202 = vector.extract_strided_slice %201 {offsets = [0, 0], sizes = [8, 64], strides = [1, 1]} : vector<8x96xf32> to vector<8x64xf32>
    %203 = arith.negf %202 : vector<8x64xf32>
    %204 = math.exp %203 : vector<8x64xf32>
    %cst_46 = arith.constant 1.000000e+00 : f32
    %205 = vector.broadcast %cst_46 : f32 to vector<8x64xf32>
    %206 = arith.addf %205, %204 : vector<8x64xf32>
    %207 = arith.divf %205, %206 : vector<8x64xf32>
    %208 = vector.extract_strided_slice %207 {offsets = [0, 0], sizes = [8, 32], strides = [1, 1]} : vector<8x64xf32> to vector<8x32xf32>
    %209 = vector.extract_strided_slice %207 {offsets = [0, 32], sizes = [8, 32], strides = [1, 1]} : vector<8x64xf32> to vector<8x32xf32>
    %210 = vector.extract_strided_slice %7 {offsets = [7, 0, 64], sizes = [1, 8, 32], strides = [1, 1, 1]} : vector<8x8x96xf32> to vector<1x8x32xf32>
    %211 = vector.shape_cast %210 : vector<1x8x32xf32> to vector<8x32xf32>
    %212 = vector.extract_strided_slice %198 {offsets = [0, 64], sizes = [8, 32], strides = [1, 1]} : vector<8x96xf32> to vector<8x32xf32>
    %213 = arith.mulf %208, %212 : vector<8x32xf32>
    %214 = arith.addf %211, %213 : vector<8x32xf32>
    %215 = math.tanh %214 : vector<8x32xf32>
    %cst_47 = arith.constant 1.000000e+00 : f32
    %216 = vector.broadcast %cst_47 : f32 to vector<8x32xf32>
    %217 = arith.subf %216, %209 : vector<8x32xf32>
    %218 = arith.mulf %217, %215 : vector<8x32xf32>
    %219 = arith.mulf %209, %193 : vector<8x32xf32>
    %220 = arith.addf %218, %219 : vector<8x32xf32>
    %c7 = arith.constant 7 : index
    %c0_48 = arith.constant 0 : index
    %c0_49 = arith.constant 0 : index
    %221 = vector.load %arg6[%c7, %c0_48, %c0_49] : memref<8x8x32xf32, #tpu.memory_space<vmem>>, vector<1x8x32xf32>
    %222 = vector.shape_cast %221 : vector<1x8x32xf32> to vector<8x32xf32>
    %223 = vector.shape_cast %220 : vector<8x32xf32> to vector<1x8x32xf32>
    tpu.vector_store %arg6[%c7, %c0_48, %c0_49], %223 {strides = array<i32>} : memref<8x8x32xf32, #tpu.memory_space<vmem>>, vector<1x8x32xf32>,
    return
  }
  func.func @transform_0(%arg0: i32) -> (i32, i32, i32) {
    %c0_i32 = arith.constant 0 : i32
    %c0_i32_0 = arith.constant 0 : i32
    %c0_i32_1 = arith.constant 0 : i32
    %c0_i32_2 = arith.constant 0 : i32
    return %c0_i32, %c0_i32_0, %c0_i32_1 : i32, i32, i32
  }
  func.func @transform_1(%arg0: i32) -> (i32, i32) {
    %c0_i32 = arith.constant 0 : i32
    %c0_i32_0 = arith.constant 0 : i32
    %c0_i32_1 = arith.constant 0 : i32
    return %c0_i32, %c0_i32_0 : i32, i32
  }
  func.func @transform_2(%arg0: i32) -> (i32, i32) {
    %c0_i32 = arith.constant 0 : i32
    %c0_i32_0 = arith.constant 0 : i32
    %c0_i32_1 = arith.constant 0 : i32
    return %c0_i32, %c0_i32_0 : i32, i32
  }
  func.func @transform_3(%arg0: i32) -> (i32, i32) {
    %c0_i32 = arith.constant 0 : i32
    %c0_i32_0 = arith.constant 0 : i32
    %c0_i32_1 = arith.constant 0 : i32
    return %c0_i32, %c0_i32_0 : i32, i32
  }
  func.func @transform_4(%arg0: i32) -> (i32, i32) {
    %c0_i32 = arith.constant 0 : i32
    %c0_i32_0 = arith.constant 0 : i32
    %c0_i32_1 = arith.constant 0 : i32
    return %c0_i32, %c0_i32_0 : i32, i32
  }
  func.func @transform_5(%arg0: i32) -> (i32, i32, i32) {
    %c0_i32 = arith.constant 0 : i32
    %c0_i32_0 = arith.constant 0 : i32
    %c0_i32_1 = arith.constant 0 : i32
    %c0_i32_2 = arith.constant 0 : i32
    return %c0_i32, %c0_i32_0, %c0_i32_1 : i32, i32, i32
  }
}

</mosaic_0001>

<llo_original>
// kernel: tpu_custom_call.1
$region0: #{tpu_custom_call.1}
  #allocation0 [shape = 'u32[]', space=smem, size = 0x4, offset = 0x4, fixed_abs, tag = 'smem constant byte address 0x4 - core index']
  #allocation1 [shape = 'u32[144,128]{1,0:T(1,128)}', space=vmem, size = 0x12000, scoped, tag = 'internal scratch']
  %s0 = inlined_call_operand.hbm [shape: f32[8,8,8], index: 0, kind: input, shape index: {}]
  %s1 = inlined_call_operand.hbm [shape: f32[8,96], index: 1, kind: input, shape index: {}]
  %s2 = inlined_call_operand.hbm [shape: f32[32,96], index: 2, kind: input, shape index: {}]
  %s3 = inlined_call_operand.vmem [shape: f32[1,96], index: 3, kind: input, shape index: {}]
  %s4 = inlined_call_operand.vmem [shape: f32[1,96], index: 4, kind: input, shape index: {}]
  %s5 = inlined_call_operand.hbm [shape: f32[8,8,32], index: 5, kind: output, shape index: {}]
  %s6 = sld [smem:[#allocation0]]
  $region42: #{tpu_custom_call.1} parent=0
    _
  %s8 = ssub.s32 1, %s6
  %s9 = scalar_select 0, %s8, %s6
  $region1: #{tpu_custom_call.1} parent=0
    #allocation2 [shape = 'u8[32768]{0}', space=vmem, size = 0x8000, scoped, tag = 'input window, operand 0, single buffered']
    #allocation3 [shape = 's32[1]{0}', space=sflag, size = 0x4, scoped, tag = 'scoped memory for tpu_custom_call.1']
    #allocation4 [shape = 's32[1]{0}', space=sflag, size = 0x4, scoped, tag = 'scoped memory for tpu_custom_call.1']
    #allocation5 [shape = 'u8[4096]{0}', space=vmem, size = 0x1000, scoped, tag = 'input window, operand 1, single buffered']
    #allocation6 [shape = 's32[1]{0}', space=sflag, size = 0x4, scoped, tag = 'scoped memory for tpu_custom_call.1']
    #allocation7 [shape = 'u8[16384]{0}', space=vmem, size = 0x4000, scoped, tag = 'input window, operand 2, single buffered']
    #allocation8 [shape = 'u8[32768]{0}', space=vmem, size = 0x8000, scoped, tag = 'output window, operand 0, single buffered']
    %10 = vsyncpa [#allocation3], 0
    %11 = vsyncpa [#allocation6], 0
    %12 = vsyncpa [#allocation4], 0
    // Predicated region
    $region2: #{tpu_custom_call.1} parent=1 // pred_check
      _
    $region3: #{tpu_custom_call.1} parent=1 // pred_check_branch
      %14 = sbr.rel (0) target = $region5
    $region4: #{tpu_custom_call.1} parent=1 // pred_region
      %s16 = ssub.s32 1024, 1024
      %17 = vsyncadd [#allocation3], %s16
      %s18 = sshll.u32 [#allocation2], 4
      %s19 = int_to_ptr.vmem [resolvable:$true] %s18
      %24 = dma.hbm_to_vmem [thread:$0]  %s0, 1024, %s19, [#allocation3], 128, 128, 8
    $region5: #{tpu_custom_call.1} parent=1 // pred_fallthru
      _
    // Predicated region
    $region6: #{tpu_custom_call.1} parent=1 // pred_check
      _
    $region7: #{tpu_custom_call.1} parent=1 // pred_check_branch
      %26 = sbr.rel (0) target = $region9
    $region8: #{tpu_custom_call.1} parent=1 // pred_region
      %s28 = ssub.s32 128, 128
      %29 = vsyncadd [#allocation6], %s28
      %s31 = sshll.u32 [#allocation5], 4
      %s32 = int_to_ptr.vmem [resolvable:$true] %s31
      %34 = dma.hbm_to_vmem [thread:$0]  %s1, 128, %s32, [#allocation6]
    $region9: #{tpu_custom_call.1} parent=1 // pred_fallthru
      _
    // Predicated region
    $region10: #{tpu_custom_call.1} parent=1 // pred_check
      _
    $region11: #{tpu_custom_call.1} parent=1 // pred_check_branch
      %36 = sbr.rel (0) target = $region13
    $region12: #{tpu_custom_call.1} parent=1 // pred_region
      %s38 = ssub.s32 512, 512
      %39 = vsyncadd [#allocation6], %s38
      %s40 = sshll.u32 [#allocation7], 4
      %s41 = int_to_ptr.vmem [resolvable:$true] %s40
      %46 = dma.hbm_to_vmem [thread:$0]  %s2, 512, %s41, [#allocation6], 128, 128, 8
    $region13: #{tpu_custom_call.1} parent=1 // pred_fallthru
      _
    // Predicated region
    $region14: #{tpu_custom_call.1} parent=1 // pred_check
      _
    $region15: #{tpu_custom_call.1} parent=1 // pred_check_branch
      %48 = sbr.rel (0) target = $region17
    $region16: #{tpu_custom_call.1} parent=1 // pred_region
      _
    $region17: #{tpu_custom_call.1} parent=1 // pred_fallthru
      _
    // Predicated region
    $region18: #{tpu_custom_call.1} parent=1 // pred_check
      _
    $region19: #{tpu_custom_call.1} parent=1 // pred_check_branch
      %50 = sbr.rel (0) target = $region21
    $region20: #{tpu_custom_call.1} parent=1 // pred_region
      _
    $region21: #{tpu_custom_call.1} parent=1 // pred_fallthru
      _
    // Predicated region
    $region22: #{tpu_custom_call.1} parent=1 // pred_check
      _
    $region23: #{tpu_custom_call.1} parent=1 // pred_check_branch
      %52 = sbr.rel (0) target = $region25
    $region24: #{tpu_custom_call.1} parent=1 // pred_region
      %53 = dma.done [#allocation3], 1024
    $region25: #{tpu_custom_call.1} parent=1 // pred_fallthru
      _
    // Predicated region
    $region26: #{tpu_custom_call.1} parent=1 // pred_check
      _
    $region27: #{tpu_custom_call.1} parent=1 // pred_check_branch
      %55 = sbr.rel (0) target = $region29
    $region28: #{tpu_custom_call.1} parent=1 // pred_region
      %56 = dma.done [#allocation6], 128
    $region29: #{tpu_custom_call.1} parent=1 // pred_fallthru
      _
    // Predicated region
    $region30: #{tpu_custom_call.1} parent=1 // pred_check
      _
    $region31: #{tpu_custom_call.1} parent=1 // pred_check_branch
      %58 = sbr.rel (0) target = $region33
    $region32: #{tpu_custom_call.1} parent=1 // pred_region
      %59 = dma.done [#allocation6], 512
    $region33: #{tpu_custom_call.1} parent=1 // pred_fallthru
      _
    %v60 = vld [vmem:[#allocation2] sm:$0xff]
    %v61 = vld [vmem:[#allocation2 + $0x8] sm:$0xff]
    %v62 = vld [vmem:[#allocation2 + $0x10] sm:$0xff]
    %v63 = vld [vmem:[#allocation2 + $0x18] sm:$0xff]
    %v64 = vld [vmem:[#allocation2 + $0x20] sm:$0xff]
    %v65 = vld [vmem:[#allocation2 + $0x28] sm:$0xff]
    %v66 = vld [vmem:[#allocation2 + $0x30] sm:$0xff]
    %v67 = vld [vmem:[#allocation2 + $0x38] sm:$0xff]
    %v68 = vld [vmem:[#allocation5] sm:$0xff]
    %v69 = vld [vmem:[%s3] sm:$0x1]
    %v71 = vlaneseq
    %v72 = vshrl.u32 %v71, 7
    %v73 = vsub.s32 0, %v72
    %v74 = vrot.slane %v69, %v73
    %vm76 = vcmask 64512
    %v78 = vsel %vm76, %v60, 0
    %v81 = vsel %vm76, %v61, 0
    %v84 = vsel %vm76, %v62, 0
    %v87 = vsel %vm76, %v63, 0
    %v90 = vsel %vm76, %v64, 0
    %v93 = vsel %vm76, %v65, 0
    %v96 = vsel %vm76, %v66, 0
    %v99 = vsel %vm76, %v67, 0
    %101 = vmatprep.subr.mxu0 0.0
    %102 = vmatpush1.msra.mxu0 %v68
    %103 = vmatprep.subr.mxu0 0.0
    %104 = vmatpush1.msra.mxu0 0.0
    %105 = vmatprep.subr.mxu0 0.0
    %106 = vmatpush1.msra.mxu0 0.0
    %107 = vmatprep.subr.mxu0 0.0
    %108 = vmatpush1.msra.mxu0 0.0
    %109 = vmatprep.subr.mxu0 0.0
    %110 = vmatpush1.msra.mxu0 0.0
    %111 = vmatprep.subr.mxu0 0.0
    %112 = vmatpush1.msra.mxu0 0.0
    %113 = vmatprep.subr.mxu0 0.0
    %114 = vmatpush1.msra.mxu0 0.0
    %115 = vmatprep.subr.mxu0 0.0
    %116 = vmatpush1.msra.mxu0 0.0
    %117 = vmatprep.subr.mxu0 0.0
    %118 = vmatpush1.msra.mxu0 0.0
    %119 = vmatprep.subr.mxu0 0.0
    %120 = vmatpush1.msra.mxu0 0.0
    %121 = vmatprep.subr.mxu0 0.0
    %122 = vmatpush1.msra.mxu0 0.0
    %123 = vmatprep.subr.mxu0 0.0
    %124 = vmatpush1.msra.mxu0 0.0
    %125 = vmatprep.subr.mxu0 0.0
    %126 = vmatpush1.msra.mxu0 0.0
    %127 = vmatprep.subr.mxu0 0.0
    %128 = vmatpush1.msra.mxu0 0.0
    %129 = vmatprep.subr.mxu0 0.0
    %130 = vmatpush1.msra.mxu0 0.0
    %131 = vmatprep.subr.mxu0 0.0
    %132 = vmatpush1.msra.mxu0 0.0
    %133 = vmatprep.subr.mxu0 0.0
    %134 = vmatpush1.msra.mxu0 0.0
    %135 = vmatprep.subr.mxu0 0.0
    %136 = vmatpush1.msra.mxu0 0.0
    %137 = vmatprep.subr.mxu0 0.0
    %138 = vmatpush1.msra.mxu0 0.0
    %139 = vmatprep.subr.mxu0 0.0
    %140 = vmatpush1.msra.mxu0 0.0
    %141 = vmatprep.subr.mxu0 0.0
    %142 = vmatpush1.msra.mxu0 0.0
    %143 = vmatprep.subr.mxu0 0.0
    %144 = vmatpush1.msra.mxu0 0.0
    %145 = vmatprep.subr.mxu0 0.0
    %146 = vmatpush1.msra.mxu0 0.0
    %147 = vmatprep.subr.mxu0 0.0
    %148 = vmatpush1.msra.mxu0 0.0
    %149 = vmatprep.subr.mxu0 0.0
    %150 = vmatpush1.msra.mxu0 0.0
    %151 = vmatprep.subr.mxu0 0.0
    %152 = vmatpush1.msra.mxu0 0.0
    %153 = vmatprep.subr.mxu0 0.0
    %154 = vmatpush1.msra.mxu0 0.0
    %155 = vmatprep.subr.mxu0 0.0
    %156 = vmatpush1.msra.mxu0 0.0
    %157 = vmatprep.subr.mxu0 0.0
    %158 = vmatpush1.msra.mxu0 0.0
    %159 = vmatprep.subr.mxu0 0.0
    %160 = vmatpush1.msra.mxu0 0.0
    %161 = vmatprep.subr.mxu0 0.0
    %162 = vmatpush1.msra.mxu0 0.0
    %163 = vmatprep.subr.mxu0 0.0
    %164 = vmatpush1.msra.mxu0 0.0
    %165 = vmatprep.mubr.f32.mxu0 0.0
    %166 = vmatmul.mubr.f32.gmra.mrb[0].mxu0 %v78
    %v167 = vpop.f32.mrb[0].mxu0
    %v168 = vadd.f32 %v74, %v167
    %v169 = vpop.f32.mrb[0].mxu0
    %170 = vmatprep.mubr.f32.mxu0 0.0
    %171 = vmatmul.mubr.f32.gmra.mrb[0].mxu0 %v81
    %v172 = vpop.f32.mrb[0].mxu0
    %v173 = vadd.f32 %v74, %v172
    %v174 = vpop.f32.mrb[0].mxu0
    %175 = vmatprep.mubr.f32.mxu0 0.0
    %176 = vmatmul.mubr.f32.gmra.mrb[0].mxu0 %v84
    %v177 = vpop.f32.mrb[0].mxu0
    %v178 = vadd.f32 %v74, %v177
    %v179 = vpop.f32.mrb[0].mxu0
    %180 = vmatprep.mubr.f32.mxu0 0.0
    %181 = vmatmul.mubr.f32.gmra.mrb[0].mxu0 %v87
    %v182 = vpop.f32.mrb[0].mxu0
    %v183 = vadd.f32 %v74, %v182
    %v184 = vpop.f32.mrb[0].mxu0
    %185 = vmatprep.mubr.f32.mxu0 0.0
    %186 = vmatmul.mubr.f32.gmra.mrb[0].mxu0 %v90
    %v187 = vpop.f32.mrb[0].mxu0
    %v188 = vadd.f32 %v74, %v187
    %v189 = vpop.f32.mrb[0].mxu0
    %190 = vmatprep.mubr.f32.mxu0 0.0
    %191 = vmatmul.mubr.f32.gmra.mrb[0].mxu0 %v93
    %v192 = vpop.f32.mrb[0].mxu0
    %v193 = vadd.f32 %v74, %v192
    %v194 = vpop.f32.mrb[0].mxu0
    %195 = vmatprep.mubr.f32.mxu0 0.0
    %196 = vmatmul.mubr.f32.gmra.mrb[0].mxu0 %v96
    %v197 = vpop.f32.mrb[0].mxu0
    %v198 = vadd.f32 %v74, %v197
    %v199 = vpop.f32.mrb[0].mxu0
    %200 = vmatprep.mubr.f32.mxu0 0.0
    %201 = vmatmul.mubr.f32.gmra.mrb[0].mxu0 %v99
    %v202 = vpop.f32.mrb[0].mxu0
    %v203 = vadd.f32 %v74, %v202
    %v204 = vpop.f32.mrb[0].mxu0
    %205 = vdwg.mxu0
    %v206 = vld [vmem:[#allocation7] sm:$0xff]
    %v207 = vld [vmem:[#allocation7 + $0x8] sm:$0xff]
    %v208 = vld [vmem:[#allocation7 + $0x10] sm:$0xff]
    %v209 = vld [vmem:[#allocation7 + $0x18] sm:$0xff]
    %v210 = vld [vmem:[%s4] sm:$0x1]
    %v212 = vlaneseq
    %v213 = vshrl.u32 %v212, 7
    %v214 = vsub.s32 0, %v213
    %v215 = vrot.slane %v210, %v214
    %v217 = vadd.f32 %v168, %v215
    %v218 = vxor.u32 %v217, 2147483648
    %v219 = vmul.f32 %v218, 1.442695
    %v220 = vpow.pop %v219
    %v221 = vadd.f32 %v220, 1.0
    %v222 = vrcp.pop %v221
    %v223 = vmul.f32 1.0, %v222
    %224 = vrot.lane.b32.xlu0 %v215, 64
    %v225 = vpop.permute.xlu0 %224
    %v227 = vmul.f32 %v223, %v225
    %229 = vrot.lane.b32.xlu0 %v227, 64
    %v230 = vpop.permute.xlu0 %229
    %v232 = vadd.f32 %v168, %v230
    %v233 = vtanh.pop %v232
    %v234 = vsub.f32 1.0, %v223
    %236 = vrot.lane.b32.xlu0 %v233, 96
    %v237 = vpop.permute.xlu0 %236
    %v239 = vmul.f32 %v234, %v237
    %241 = vrot.lane.b32.xlu0 %v239, 96
    %v242 = vpop.permute.xlu0 %241
    %vm244 = vcmask 261120
    %245 = vst.msk [vmem:[#allocation8] sm:$0xff] %vm244, %v242
    %v246 = vsel %vm244, %v242, 0
    %248 = vmatprep.subr.mxu0 0.0
    %249 = vmatpush1.msra.mxu0 %v206
    %250 = vmatprep.subr.mxu0 0.0
    %251 = vmatpush1.msra.mxu0 %v207
    %252 = vmatprep.subr.mxu0 0.0
    %253 = vmatpush1.msra.mxu0 %v208
    %254 = vmatprep.subr.mxu0 0.0
    %255 = vmatpush1.msra.mxu0 %v209
    %256 = vmatprep.subr.mxu0 0.0
    %257 = vmatpush1.msra.mxu0 0.0
    %258 = vmatprep.subr.mxu0 0.0
    %259 = vmatpush1.msra.mxu0 0.0
    %260 = vmatprep.subr.mxu0 0.0
    %261 = vmatpush1.msra.mxu0 0.0
    %262 = vmatprep.subr.mxu0 0.0
    %263 = vmatpush1.msra.mxu0 0.0
    %264 = vmatprep.subr.mxu0 0.0
    %265 = vmatpush1.msra.mxu0 0.0
    %266 = vmatprep.subr.mxu0 0.0
    %267 = vmatpush1.msra.mxu0 0.0
    %268 = vmatprep.subr.mxu0 0.0
    %269 = vmatpush1.msra.mxu0 0.0
    %270 = vmatprep.subr.mxu0 0.0
    %271 = vmatpush1.msra.mxu0 0.0
    %272 = vmatprep.subr.mxu0 0.0
    %273 = vmatpush1.msra.mxu0 0.0
    %274 = vmatprep.subr.mxu0 0.0
    %275 = vmatpush1.msra.mxu0 0.0
    %276 = vmatprep.subr.mxu0 0.0
    %277 = vmatpush1.msra.mxu0 0.0
    %278 = vmatprep.subr.mxu0 0.0
    %279 = vmatpush1.msra.mxu0 0.0
    %280 = vmatprep.subr.mxu0 0.0
    %281 = vmatpush1.msra.mxu0 0.0
    %282 = vmatprep.subr.mxu0 0.0
    %283 = vmatpush1.msra.mxu0 0.0
    %284 = vmatprep.subr.mxu0 0.0
    %285 = vmatpush1.msra.mxu0 0.0
    %286 = vmatprep.subr.mxu0 0.0
    %287 = vmatpush1.msra.mxu0 0.0
    %288 = vmatprep.subr.mxu0 0.0
    %289 = vmatpush1.msra.mxu0 0.0
    %290 = vmatprep.subr.mxu0 0.0
    %291 = vmatpush1.msra.mxu0 0.0
    %292 = vmatprep.subr.mxu0 0.0
    %293 = vmatpush1.msra.mxu0 0.0
    %294 = vmatprep.subr.mxu0 0.0
    %295 = vmatpush1.msra.mxu0 0.0
    %296 = vmatprep.subr.mxu0 0.0
    %297 = vmatpush1.msra.mxu0 0.0
    %298 = vmatprep.subr.mxu0 0.0
    %299 = vmatpush1.msra.mxu0 0.0
    %300 = vmatprep.subr.mxu0 0.0
    %301 = vmatpush1.msra.mxu0 0.0
    %302 = vmatprep.subr.mxu0 0.0
    %303 = vmatpush1.msra.mxu0 0.0
    %304 = vmatprep.subr.mxu0 0.0
    %305 = vmatpush1.msra.mxu0 0.0
    %306 = vmatprep.subr.mxu0 0.0
    %307 = vmatpush1.msra.mxu0 0.0
    %308 = vmatprep.subr.mxu0 0.0
    %309 = vmatpush1.msra.mxu0 0.0
    %310 = vmatprep.subr.mxu0 0.0
    %311 = vmatpush1.msra.mxu0 0.0
    %312 = vmatprep.mubr.f32.mxu0 0.0
    %313 = vmatmul.mubr.f32.gmra.mrb[0].mxu0 %v246
    %v314 = vpop.f32.mrb[0].mxu0
    %v315 = vadd.f32 %v215, %v314
    %v316 = vpop.f32.mrb[0].mxu0
    %317 = vdwg.mxu0
    %v318 = vadd.f32 %v173, %v315
    %v319 = vxor.u32 %v318, 2147483648
    %v320 = vmul.f32 %v319, 1.442695
    %v321 = vpow.pop %v320
    %v322 = vadd.f32 %v321, 1.0
    %v323 = vrcp.pop %v322
    %v324 = vmul.f32 1.0, %v323
    %326 = vrot.lane.b32.xlu0 %v315, 64
    %v327 = vpop.permute.xlu0 %326
    %v329 = vmul.f32 %v324, %v327
    %331 = vrot.lane.b32.xlu0 %v329, 64
    %v332 = vpop.permute.xlu0 %331
    %v334 = vadd.f32 %v173, %v332
    %v335 = vtanh.pop %v334
    %v336 = vsub.f32 1.0, %v324
    %338 = vrot.lane.b32.xlu0 %v335, 96
    %v339 = vpop.permute.xlu0 %338
    %v341 = vmul.f32 %v336, %v339
    %v342 = vmul.f32 %v324, %v239
    %v343 = vadd.f32 %v341, %v342
    %345 = vrot.lane.b32.xlu0 %v343, 96
    %v346 = vpop.permute.xlu0 %345
    %s348 = scalar_lea.vmem [#allocation8], 8
    %349 = vst.msk [vmem:[%s348] sm:$0xff] %vm244, %v346
    %v350 = vsel %vm244, %v346, 0
    %352 = vmatprep.subr.mxu0 0.0
    %353 = vmatpush1.msra.mxu0 %v206
    %354 = vmatprep.subr.mxu0 0.0
    %355 = vmatpush1.msra.mxu0 %v207
    %356 = vmatprep.subr.mxu0 0.0
    %357 = vmatpush1.msra.mxu0 %v208
    %358 = vmatprep.subr.mxu0 0.0
    %359 = vmatpush1.msra.mxu0 %v209
    %360 = vmatprep.subr.mxu0 0.0
    %361 = vmatpush1.msra.mxu0 0.0
    %362 = vmatprep.subr.mxu0 0.0
    %363 = vmatpush1.msra.mxu0 0.0
    %364 = vmatprep.subr.mxu0 0.0
    %365 = vmatpush1.msra.mxu0 0.0
    %366 = vmatprep.subr.mxu0 0.0
    %367 = vmatpush1.msra.mxu0 0.0
    %368 = vmatprep.subr.mxu0 0.0
    %369 = vmatpush1.msra.mxu0 0.0
    %370 = vmatprep.subr.mxu0 0.0
    %371 = vmatpush1.msra.mxu0 0.0
    %372 = vmatprep.subr.mxu0 0.0
    %373 = vmatpush1.msra.mxu0 0.0
    %374 = vmatprep.subr.mxu0 0.0
    %375 = vmatpush1.msra.mxu0 0.0
    %376 = vmatprep.subr.mxu0 0.0
    %377 = vmatpush1.msra.mxu0 0.0
    %378 = vmatprep.subr.mxu0 0.0
    %379 = vmatpush1.msra.mxu0 0.0
    %380 = vmatprep.subr.mxu0 0.0
    %381 = vmatpush1.msra.mxu0 0.0
    %382 = vmatprep.subr.mxu0 0.0
    %383 = vmatpush1.msra.mxu0 0.0
    %384 = vmatprep.subr.mxu0 0.0
    %385 = vmatpush1.msra.mxu0 0.0
    %386 = vmatprep.subr.mxu0 0.0
    %387 = vmatpush1.msra.mxu0 0.0
    %388 = vmatprep.subr.mxu0 0.0
    %389 = vmatpush1.msra.mxu0 0.0
    %390 = vmatprep.subr.mxu0 0.0
    %391 = vmatpush1.msra.mxu0 0.0
    %392 = vmatprep.subr.mxu0 0.0
    %393 = vmatpush1.msra.mxu0 0.0
    %394 = vmatprep.subr.mxu0 0.0
    %395 = vmatpush1.msra.mxu0 0.0
    %396 = vmatprep.subr.mxu0 0.0
    %397 = vmatpush1.msra.mxu0 0.0
    %398 = vmatprep.subr.mxu0 0.0
    %399 = vmatpush1.msra.mxu0 0.0
    %400 = vmatprep.subr.mxu0 0.0
    %401 = vmatpush1.msra.mxu0 0.0
    %402 = vmatprep.subr.mxu0 0.0
    %403 = vmatpush1.msra.mxu0 0.0
    %404 = vmatprep.subr.mxu0 0.0
    %405 = vmatpush1.msra.mxu0 0.0
    %406 = vmatprep.subr.mxu0 0.0
    %407 = vmatpush1.msra.mxu0 0.0
    %408 = vmatprep.subr.mxu0 0.0
    %409 = vmatpush1.msra.mxu0 0.0
    %410 = vmatprep.subr.mxu0 0.0
    %411 = vmatpush1.msra.mxu0 0.0
    %412 = vmatprep.subr.mxu0 0.0
    %413 = vmatpush1.msra.mxu0 0.0
    %414 = vmatprep.subr.mxu0 0.0
    %415 = vmatpush1.msra.mxu0 0.0
    %416 = vmatprep.mubr.f32.mxu0 0.0
    %417 = vmatmul.mubr.f32.gmra.mrb[0].mxu0 %v350
    %v418 = vpop.f32.mrb[0].mxu0
    %v419 = vadd.f32 %v215, %v418
    %v420 = vpop.f32.mrb[0].mxu0
    %421 = vdwg.mxu0
    %v422 = vadd.f32 %v178, %v419
    %v423 = vxor.u32 %v422, 2147483648
    %v424 = vmul.f32 %v423, 1.442695
    %v425 = vpow.pop %v424
    %v426 = vadd.f32 %v425, 1.0
    %v427 = vrcp.pop %v426
    %v428 = vmul.f32 1.0, %v427
    %430 = vrot.lane.b32.xlu0 %v419, 64
    %v431 = vpop.permute.xlu0 %430
    %v433 = vmul.f32 %v428, %v431
    %435 = vrot.lane.b32.xlu0 %v433, 64
    %v436 = vpop.permute.xlu0 %435
    %v438 = vadd.f32 %v178, %v436
    %v439 = vtanh.pop %v438
    %v440 = vsub.f32 1.0, %v428
    %442 = vrot.lane.b32.xlu0 %v439, 96
    %v443 = vpop.permute.xlu0 %442
    %v445 = vmul.f32 %v440, %v443
    %v446 = vmul.f32 %v428, %v343
    %v447 = vadd.f32 %v445, %v446
    %449 = vrot.lane.b32.xlu0 %v447, 96
    %v450 = vpop.permute.xlu0 %449
    %s452 = scalar_lea.vmem [#allocation8], 16
    %453 = vst.msk [vmem:[%s452] sm:$0xff] %vm244, %v450
    %v454 = vsel %vm244, %v450, 0
    %456 = vmatprep.subr.mxu0 0.0
    %457 = vmatpush1.msra.mxu0 %v206
    %458 = vmatprep.subr.mxu0 0.0
    %459 = vmatpush1.msra.mxu0 %v207
    %460 = vmatprep.subr.mxu0 0.0
    %461 = vmatpush1.msra.mxu0 %v208
    %462 = vmatprep.subr.mxu0 0.0
    %463 = vmatpush1.msra.mxu0 %v209
    %464 = vmatprep.subr.mxu0 0.0
    %465 = vmatpush1.msra.mxu0 0.0
    %466 = vmatprep.subr.mxu0 0.0
    %467 = vmatpush1.msra.mxu0 0.0
    %468 = vmatprep.subr.mxu0 0.0
    %469 = vmatpush1.msra.mxu0 0.0
    %470 = vmatprep.subr.mxu0 0.0
    %471 = vmatpush1.msra.mxu0 0.0
    %472 = vmatprep.subr.mxu0 0.0
    %473 = vmatpush1.msra.mxu0 0.0
    %474 = vmatprep.subr.mxu0 0.0
    %475 = vmatpush1.msra.mxu0 0.0
    %476 = vmatprep.subr.mxu0 0.0
    %477 = vmatpush1.msra.mxu0 0.0
    %478 = vmatprep.subr.mxu0 0.0
    %479 = vmatpush1.msra.mxu0 0.0
    %480 = vmatprep.subr.mxu0 0.0
    %481 = vmatpush1.msra.mxu0 0.0
    %482 = vmatprep.subr.mxu0 0.0
    %483 = vmatpush1.msra.mxu0 0.0
    %484 = vmatprep.subr.mxu0 0.0
    %485 = vmatpush1.msra.mxu0 0.0
    %486 = vmatprep.subr.mxu0 0.0
    %487 = vmatpush1.msra.mxu0 0.0
    %488 = vmatprep.subr.mxu0 0.0
    %489 = vmatpush1.msra.mxu0 0.0
    %490 = vmatprep.subr.mxu0 0.0
    %491 = vmatpush1.msra.mxu0 0.0
    %492 = vmatprep.subr.mxu0 0.0
    %493 = vmatpush1.msra.mxu0 0.0
    %494 = vmatprep.subr.mxu0 0.0
    %495 = vmatpush1.msra.mxu0 0.0
    %496 = vmatprep.subr.mxu0 0.0
    %497 = vmatpush1.msra.mxu0 0.0
    %498 = vmatprep.subr.mxu0 0.0
    %499 = vmatpush1.msra.mxu0 0.0
    %500 = vmatprep.subr.mxu0 0.0
    %501 = vmatpush1.msra.mxu0 0.0
    %502 = vmatprep.subr.mxu0 0.0
    %503 = vmatpush1.msra.mxu0 0.0
    %504 = vmatprep.subr.mxu0 0.0
    %505 = vmatpush1.msra.mxu0 0.0
    %506 = vmatprep.subr.mxu0 0.0
    %507 = vmatpush1.msra.mxu0 0.0
    %508 = vmatprep.subr.mxu0 0.0
    %509 = vmatpush1.msra.mxu0 0.0
    %510 = vmatprep.subr.mxu0 0.0
    %511 = vmatpush1.msra.mxu0 0.0
    %512 = vmatprep.subr.mxu0 0.0
    %513 = vmatpush1.msra.mxu0 0.0
    %514 = vmatprep.subr.mxu0 0.0
    %515 = vmatpush1.msra.mxu0 0.0
    %516 = vmatprep.subr.mxu0 0.0
    %517 = vmatpush1.msra.mxu0 0.0
    %518 = vmatprep.subr.mxu0 0.0
    %519 = vmatpush1.msra.mxu0 0.0
    %520 = vmatprep.mubr.f32.mxu0 0.0
    %521 = vmatmul.mubr.f32.gmra.mrb[0].mxu0 %v454
    %v522 = vpop.f32.mrb[0].mxu0
    %v523 = vadd.f32 %v215, %v522
    %v524 = vpop.f32.mrb[0].mxu0
    %525 = vdwg.mxu0
    %v526 = vadd.f32 %v183, %v523
    %v527 = vxor.u32 %v526, 2147483648
    %v528 = vmul.f32 %v527, 1.442695
    %v529 = vpow.pop %v528
    %v530 = vadd.f32 %v529, 1.0
    %v531 = vrcp.pop %v530
    %v532 = vmul.f32 1.0, %v531
    %534 = vrot.lane.b32.xlu0 %v523, 64
    %v535 = vpop.permute.xlu0 %534
    %v537 = vmul.f32 %v532, %v535
    %539 = vrot.lane.b32.xlu0 %v537, 64
    %v540 = vpop.permute.xlu0 %539
    %v542 = vadd.f32 %v183, %v540
    %v543 = vtanh.pop %v542
    %v544 = vsub.f32 1.0, %v532
    %546 = vrot.lane.b32.xlu0 %v543, 96
    %v547 = vpop.permute.xlu0 %546
    %v549 = vmul.f32 %v544, %v547
    %v550 = vmul.f32 %v532, %v447
    %v551 = vadd.f32 %v549, %v550
    %553 = vrot.lane.b32.xlu0 %v551, 96
    %v554 = vpop.permute.xlu0 %553
    %s556 = scalar_lea.vmem [#allocation8], 24
    %557 = vst.msk [vmem:[%s556] sm:$0xff] %vm244, %v554
    %v558 = vsel %vm244, %v554, 0
    %560 = vmatprep.subr.mxu0 0.0
    %561 = vmatpush1.msra.mxu0 %v206
    %562 = vmatprep.subr.mxu0 0.0
    %563 = vmatpush1.msra.mxu0 %v207
    %564 = vmatprep.subr.mxu0 0.0
    %565 = vmatpush1.msra.mxu0 %v208
    %566 = vmatprep.subr.mxu0 0.0
    %567 = vmatpush1.msra.mxu0 %v209
    %568 = vmatprep.subr.mxu0 0.0
    %569 = vmatpush1.msra.mxu0 0.0
    %570 = vmatprep.subr.mxu0 0.0
    %571 = vmatpush1.msra.mxu0 0.0
    %572 = vmatprep.subr.mxu0 0.0
    %573 = vmatpush1.msra.mxu0 0.0
    %574 = vmatprep.subr.mxu0 0.0
    %575 = vmatpush1.msra.mxu0 0.0
    %576 = vmatprep.subr.mxu0 0.0
    %577 = vmatpush1.msra.mxu0 0.0
    %578 = vmatprep.subr.mxu0 0.0
    %579 = vmatpush1.msra.mxu0 0.0
    %580 = vmatprep.subr.mxu0 0.0
    %581 = vmatpush1.msra.mxu0 0.0
    %582 = vmatprep.subr.mxu0 0.0
    %583 = vmatpush1.msra.mxu0 0.0
    %584 = vmatprep.subr.mxu0 0.0
    %585 = vmatpush1.msra.mxu0 0.0
    %586 = vmatprep.subr.mxu0 0.0
    %587 = vmatpush1.msra.mxu0 0.0
    %588 = vmatprep.subr.mxu0 0.0
    %589 = vmatpush1.msra.mxu0 0.0
    %590 = vmatprep.subr.mxu0 0.0
    %591 = vmatpush1.msra.mxu0 0.0
    %592 = vmatprep.subr.mxu0 0.0
    %593 = vmatpush1.msra.mxu0 0.0
    %594 = vmatprep.subr.mxu0 0.0
    %595 = vmatpush1.msra.mxu0 0.0
    %596 = vmatprep.subr.mxu0 0.0
    %597 = vmatpush1.msra.mxu0 0.0
    %598 = vmatprep.subr.mxu0 0.0
    %599 = vmatpush1.msra.mxu0 0.0
    %600 = vmatprep.subr.mxu0 0.0
    %601 = vmatpush1.msra.mxu0 0.0
    %602 = vmatprep.subr.mxu0 0.0
    %603 = vmatpush1.msra.mxu0 0.0
    %604 = vmatprep.subr.mxu0 0.0
    %605 = vmatpush1.msra.mxu0 0.0
    %606 = vmatprep.subr.mxu0 0.0
    %607 = vmatpush1.msra.mxu0 0.0
    %608 = vmatprep.subr.mxu0 0.0
    %609 = vmatpush1.msra.mxu0 0.0
    %610 = vmatprep.subr.mxu0 0.0
    %611 = vmatpush1.msra.mxu0 0.0
    %612 = vmatprep.subr.mxu0 0.0
    %613 = vmatpush1.msra.mxu0 0.0
    %614 = vmatprep.subr.mxu0 0.0
    %615 = vmatpush1.msra.mxu0 0.0
    %616 = vmatprep.subr.mxu0 0.0
    %617 = vmatpush1.msra.mxu0 0.0
    %618 = vmatprep.subr.mxu0 0.0
    %619 = vmatpush1.msra.mxu0 0.0
    %620 = vmatprep.subr.mxu0 0.0
    %621 = vmatpush1.msra.mxu0 0.0
    %622 = vmatprep.subr.mxu0 0.0
    %623 = vmatpush1.msra.mxu0 0.0
    %624 = vmatprep.mubr.f32.mxu0 0.0
    %625 = vmatmul.mubr.f32.gmra.mrb[0].mxu0 %v558
    %v626 = vpop.f32.mrb[0].mxu0
    %v627 = vadd.f32 %v215, %v626
    %v628 = vpop.f32.mrb[0].mxu0
    %629 = vdwg.mxu0
    %v630 = vadd.f32 %v188, %v627
    %v631 = vxor.u32 %v630, 2147483648
    %v632 = vmul.f32 %v631, 1.442695
    %v633 = vpow.pop %v632
    %v634 = vadd.f32 %v633, 1.0
    %v635 = vrcp.pop %v634
    %v636 = vmul.f32 1.0, %v635
    %638 = vrot.lane.b32.xlu0 %v627, 64
    %v639 = vpop.permute.xlu0 %638
    %v641 = vmul.f32 %v636, %v639
    %643 = vrot.lane.b32.xlu0 %v641, 64
    %v644 = vpop.permute.xlu0 %643
    %v646 = vadd.f32 %v188, %v644
    %v647 = vtanh.pop %v646
    %v648 = vsub.f32 1.0, %v636
    %650 = vrot.lane.b32.xlu0 %v647, 96
    %v651 = vpop.permute.xlu0 %650
    %v653 = vmul.f32 %v648, %v651
    %v654 = vmul.f32 %v636, %v551
    %v655 = vadd.f32 %v653, %v654
    %657 = vrot.lane.b32.xlu0 %v655, 96
    %v658 = vpop.permute.xlu0 %657
    %s660 = scalar_lea.vmem [#allocation8], 32
    %661 = vst.msk [vmem:[%s660] sm:$0xff] %vm244, %v658
    %v662 = vsel %vm244, %v658, 0
    %664 = vmatprep.subr.mxu0 0.0
    %665 = vmatpush1.msra.mxu0 %v206
    %666 = vmatprep.subr.mxu0 0.0
    %667 = vmatpush1.msra.mxu0 %v207
    %668 = vmatprep.subr.mxu0 0.0
    %669 = vmatpush1.msra.mxu0 %v208
    %670 = vmatprep.subr.mxu0 0.0
    %671 = vmatpush1.msra.mxu0 %v209
    %672 = vmatprep.subr.mxu0 0.0
    %673 = vmatpush1.msra.mxu0 0.0
    %674 = vmatprep.subr.mxu0 0.0
    %675 = vmatpush1.msra.mxu0 0.0
    %676 = vmatprep.subr.mxu0 0.0
    %677 = vmatpush1.msra.mxu0 0.0
    %678 = vmatprep.subr.mxu0 0.0
    %679 = vmatpush1.msra.mxu0 0.0
    %680 = vmatprep.subr.mxu0 0.0
    %681 = vmatpush1.msra.mxu0 0.0
    %682 = vmatprep.subr.mxu0 0.0
    %683 = vmatpush1.msra.mxu0 0.0
    %684 = vmatprep.subr.mxu0 0.0
    %685 = vmatpush1.msra.mxu0 0.0
    %686 = vmatprep.subr.mxu0 0.0
    %687 = vmatpush1.msra.mxu0 0.0
    %688 = vmatprep.subr.mxu0 0.0
    %689 = vmatpush1.msra.mxu0 0.0
    %690 = vmatprep.subr.mxu0 0.0
    %691 = vmatpush1.msra.mxu0 0.0
    %692 = vmatprep.subr.mxu0 0.0
    %693 = vmatpush1.msra.mxu0 0.0
    %694 = vmatprep.subr.mxu0 0.0
    %695 = vmatpush1.msra.mxu0 0.0
    %696 = vmatprep.subr.mxu0 0.0
    %697 = vmatpush1.msra.mxu0 0.0
    %698 = vmatprep.subr.mxu0 0.0
    %699 = vmatpush1.msra.mxu0 0.0
    %700 = vmatprep.subr.mxu0 0.0
    %701 = vmatpush1.msra.mxu0 0.0
    %702 = vmatprep.subr.mxu0 0.0
    %703 = vmatpush1.msra.mxu0 0.0
    %704 = vmatprep.subr.mxu0 0.0
    %705 = vmatpush1.msra.mxu0 0.0
    %706 = vmatprep.subr.mxu0 0.0
    %707 = vmatpush1.msra.mxu0 0.0
    %708 = vmatprep.subr.mxu0 0.0
    %709 = vmatpush1.msra.mxu0 0.0
    %710 = vmatprep.subr.mxu0 0.0
    %711 = vmatpush1.msra.mxu0 0.0
    %712 = vmatprep.subr.mxu0 0.0
    %713 = vmatpush1.msra.mxu0 0.0
    %714 = vmatprep.subr.mxu0 0.0
    %715 = vmatpush1.msra.mxu0 0.0
    %716 = vmatprep.subr.mxu0 0.0
    %717 = vmatpush1.msra.mxu0 0.0
    %718 = vmatprep.subr.mxu0 0.0
    %719 = vmatpush1.msra.mxu0 0.0
    %720 = vmatprep.subr.mxu0 0.0
    %721 = vmatpush1.msra.mxu0 0.0
    %722 = vmatprep.subr.mxu0 0.0
    %723 = vmatpush1.msra.mxu0 0.0
    %724 = vmatprep.subr.mxu0 0.0
    %725 = vmatpush1.msra.mxu0 0.0
    %726 = vmatprep.subr.mxu0 0.0
    %727 = vmatpush1.msra.mxu0 0.0
    %728 = vmatprep.mubr.f32.mxu0 0.0
    %729 = vmatmul.mubr.f32.gmra.mrb[0].mxu0 %v662
    %v730 = vpop.f32.mrb[0].mxu0
    %v731 = vadd.f32 %v215, %v730
    %v732 = vpop.f32.mrb[0].mxu0
    %733 = vdwg.mxu0
    %v734 = vadd.f32 %v193, %v731
    %v735 = vxor.u32 %v734, 2147483648
    %v736 = vmul.f32 %v735, 1.442695
    %v737 = vpow.pop %v736
    %v738 = vadd.f32 %v737, 1.0
    %v739 = vrcp.pop %v738
    %v740 = vmul.f32 1.0, %v739
    %742 = vrot.lane.b32.xlu0 %v731, 64
    %v743 = vpop.permute.xlu0 %742
    %v745 = vmul.f32 %v740, %v743
    %747 = vrot.lane.b32.xlu0 %v745, 64
    %v748 = vpop.permute.xlu0 %747
    %v750 = vadd.f32 %v193, %v748
    %v751 = vtanh.pop %v750
    %v752 = vsub.f32 1.0, %v740
    %754 = vrot.lane.b32.xlu0 %v751, 96
    %v755 = vpop.permute.xlu0 %754
    %v757 = vmul.f32 %v752, %v755
    %v758 = vmul.f32 %v740, %v655
    %v759 = vadd.f32 %v757, %v758
    %761 = vrot.lane.b32.xlu0 %v759, 96
    %v762 = vpop.permute.xlu0 %761
    %s764 = scalar_lea.vmem [#allocation8], 40
    %765 = vst.msk [vmem:[%s764] sm:$0xff] %vm244, %v762
    %v766 = vsel %vm244, %v762, 0
    %768 = vmatprep.subr.mxu0 0.0
    %769 = vmatpush1.msra.mxu0 %v206
    %770 = vmatprep.subr.mxu0 0.0
    %771 = vmatpush1.msra.mxu0 %v207
    %772 = vmatprep.subr.mxu0 0.0
    %773 = vmatpush1.msra.mxu0 %v208
    %774 = vmatprep.subr.mxu0 0.0
    %775 = vmatpush1.msra.mxu0 %v209
    %776 = vmatprep.subr.mxu0 0.0
    %777 = vmatpush1.msra.mxu0 0.0
    %778 = vmatprep.subr.mxu0 0.0
    %779 = vmatpush1.msra.mxu0 0.0
    %780 = vmatprep.subr.mxu0 0.0
    %781 = vmatpush1.msra.mxu0 0.0
    %782 = vmatprep.subr.mxu0 0.0
    %783 = vmatpush1.msra.mxu0 0.0
    %784 = vmatprep.subr.mxu0 0.0
    %785 = vmatpush1.msra.mxu0 0.0
    %786 = vmatprep.subr.mxu0 0.0
    %787 = vmatpush1.msra.mxu0 0.0
    %788 = vmatprep.subr.mxu0 0.0
    %789 = vmatpush1.msra.mxu0 0.0
    %790 = vmatprep.subr.mxu0 0.0
    %791 = vmatpush1.msra.mxu0 0.0
    %792 = vmatprep.subr.mxu0 0.0
    %793 = vmatpush1.msra.mxu0 0.0
    %794 = vmatprep.subr.mxu0 0.0
    %795 = vmatpush1.msra.mxu0 0.0
    %796 = vmatprep.subr.mxu0 0.0
    %797 = vmatpush1.msra.mxu0 0.0
    %798 = vmatprep.subr.mxu0 0.0
    %799 = vmatpush1.msra.mxu0 0.0
    %800 = vmatprep.subr.mxu0 0.0
    %801 = vmatpush1.msra.mxu0 0.0
    %802 = vmatprep.subr.mxu0 0.0
    %803 = vmatpush1.msra.mxu0 0.0
    %804 = vmatprep.subr.mxu0 0.0
    %805 = vmatpush1.msra.mxu0 0.0
    %806 = vmatprep.subr.mxu0 0.0
    %807 = vmatpush1.msra.mxu0 0.0
    %808 = vmatprep.subr.mxu0 0.0
    %809 = vmatpush1.msra.mxu0 0.0
    %810 = vmatprep.subr.mxu0 0.0
    %811 = vmatpush1.msra.mxu0 0.0
    %812 = vmatprep.subr.mxu0 0.0
    %813 = vmatpush1.msra.mxu0 0.0
    %814 = vmatprep.subr.mxu0 0.0
    %815 = vmatpush1.msra.mxu0 0.0
    %816 = vmatprep.subr.mxu0 0.0
    %817 = vmatpush1.msra.mxu0 0.0
    %818 = vmatprep.subr.mxu0 0.0
    %819 = vmatpush1.msra.mxu0 0.0
    %820 = vmatprep.subr.mxu0 0.0
    %821 = vmatpush1.msra.mxu0 0.0
    %822 = vmatprep.subr.mxu0 0.0
    %823 = vmatpush1.msra.mxu0 0.0
    %824 = vmatprep.subr.mxu0 0.0
    %825 = vmatpush1.msra.mxu0 0.0
    %826 = vmatprep.subr.mxu0 0.0
    %827 = vmatpush1.msra.mxu0 0.0
    %828 = vmatprep.subr.mxu0 0.0
    %829 = vmatpush1.msra.mxu0 0.0
    %830 = vmatprep.subr.mxu0 0.0
    %831 = vmatpush1.msra.mxu0 0.0
    %832 = vmatprep.mubr.f32.mxu0 0.0
    %833 = vmatmul.mubr.f32.gmra.mrb[0].mxu0 %v766
    %v834 = vpop.f32.mrb[0].mxu0
    %v835 = vadd.f32 %v215, %v834
    %v836 = vpop.f32.mrb[0].mxu0
    %837 = vdwg.mxu0
    %v838 = vadd.f32 %v198, %v835
    %v839 = vxor.u32 %v838, 2147483648
    %v840 = vmul.f32 %v839, 1.442695
    %v841 = vpow.pop %v840
    %v842 = vadd.f32 %v841, 1.0
    %v843 = vrcp.pop %v842
    %v844 = vmul.f32 1.0, %v843
    %846 = vrot.lane.b32.xlu0 %v835, 64
    %v847 = vpop.permute.xlu0 %846
    %v849 = vmul.f32 %v844, %v847
    %851 = vrot.lane.b32.xlu0 %v849, 64
    %v852 = vpop.permute.xlu0 %851
    %v854 = vadd.f32 %v198, %v852
    %v855 = vtanh.pop %v854
    %v856 = vsub.f32 1.0, %v844
    %858 = vrot.lane.b32.xlu0 %v855, 96
    %v859 = vpop.permute.xlu0 %858
    %v861 = vmul.f32 %v856, %v859
    %v862 = vmul.f32 %v844, %v759
    %v863 = vadd.f32 %v861, %v862
    %865 = vrot.lane.b32.xlu0 %v863, 96
    %v866 = vpop.permute.xlu0 %865
    %s868 = scalar_lea.vmem [#allocation8], 48
    %869 = vst.msk [vmem:[%s868] sm:$0xff] %vm244, %v866
    %v870 = vsel %vm244, %v866, 0
    %872 = vmatprep.subr.mxu0 0.0
    %873 = vmatpush1.msra.mxu0 %v206
    %874 = vmatprep.subr.mxu0 0.0
    %875 = vmatpush1.msra.mxu0 %v207
    %876 = vmatprep.subr.mxu0 0.0
    %877 = vmatpush1.msra.mxu0 %v208
    %878 = vmatprep.subr.mxu0 0.0
    %879 = vmatpush1.msra.mxu0 %v209
    %880 = vmatprep.subr.mxu0 0.0
    %881 = vmatpush1.msra.mxu0 0.0
    %882 = vmatprep.subr.mxu0 0.0
    %883 = vmatpush1.msra.mxu0 0.0
    %884 = vmatprep.subr.mxu0 0.0
    %885 = vmatpush1.msra.mxu0 0.0
    %886 = vmatprep.subr.mxu0 0.0
    %887 = vmatpush1.msra.mxu0 0.0
    %888 = vmatprep.subr.mxu0 0.0
    %889 = vmatpush1.msra.mxu0 0.0
    %890 = vmatprep.subr.mxu0 0.0
    %891 = vmatpush1.msra.mxu0 0.0
    %892 = vmatprep.subr.mxu0 0.0
    %893 = vmatpush1.msra.mxu0 0.0
    %894 = vmatprep.subr.mxu0 0.0
    %895 = vmatpush1.msra.mxu0 0.0
    %896 = vmatprep.subr.mxu0 0.0
    %897 = vmatpush1.msra.mxu0 0.0
    %898 = vmatprep.subr.mxu0 0.0
    %899 = vmatpush1.msra.mxu0 0.0
    %900 = vmatprep.subr.mxu0 0.0
    %901 = vmatpush1.msra.mxu0 0.0
    %902 = vmatprep.subr.mxu0 0.0
    %903 = vmatpush1.msra.mxu0 0.0
    %904 = vmatprep.subr.mxu0 0.0
    %905 = vmatpush1.msra.mxu0 0.0
    %906 = vmatprep.subr.mxu0 0.0
    %907 = vmatpush1.msra.mxu0 0.0
    %908 = vmatprep.subr.mxu0 0.0
    %909 = vmatpush1.msra.mxu0 0.0
    %910 = vmatprep.subr.mxu0 0.0
    %911 = vmatpush1.msra.mxu0 0.0
    %912 = vmatprep.subr.mxu0 0.0
    %913 = vmatpush1.msra.mxu0 0.0
    %914 = vmatprep.subr.mxu0 0.0
    %915 = vmatpush1.msra.mxu0 0.0
    %916 = vmatprep.subr.mxu0 0.0
    %917 = vmatpush1.msra.mxu0 0.0
    %918 = vmatprep.subr.mxu0 0.0
    %919 = vmatpush1.msra.mxu0 0.0
    %920 = vmatprep.subr.mxu0 0.0
    %921 = vmatpush1.msra.mxu0 0.0
    %922 = vmatprep.subr.mxu0 0.0
    %923 = vmatpush1.msra.mxu0 0.0
    %924 = vmatprep.subr.mxu0 0.0
    %925 = vmatpush1.msra.mxu0 0.0
    %926 = vmatprep.subr.mxu0 0.0
    %927 = vmatpush1.msra.mxu0 0.0
    %928 = vmatprep.subr.mxu0 0.0
    %929 = vmatpush1.msra.mxu0 0.0
    %930 = vmatprep.subr.mxu0 0.0
    %931 = vmatpush1.msra.mxu0 0.0
    %932 = vmatprep.subr.mxu0 0.0
    %933 = vmatpush1.msra.mxu0 0.0
    %934 = vmatprep.subr.mxu0 0.0
    %935 = vmatpush1.msra.mxu0 0.0
    %936 = vmatprep.mubr.f32.mxu0 0.0
    %937 = vmatmul.mubr.f32.gmra.mrb[0].mxu0 %v870
    %v938 = vpop.f32.mrb[0].mxu0
    %v939 = vadd.f32 %v215, %v938
    %v940 = vpop.f32.mrb[0].mxu0
    %941 = vdwg.mxu0
    %v942 = vadd.f32 %v203, %v939
    %v943 = vxor.u32 %v942, 2147483648
    %v944 = vmul.f32 %v943, 1.442695
    %v945 = vpow.pop %v944
    %v946 = vadd.f32 %v945, 1.0
    %v947 = vrcp.pop %v946
    %v948 = vmul.f32 1.0, %v947
    %950 = vrot.lane.b32.xlu0 %v939, 64
    %v951 = vpop.permute.xlu0 %950
    %v953 = vmul.f32 %v948, %v951
    %955 = vrot.lane.b32.xlu0 %v953, 64
    %v956 = vpop.permute.xlu0 %955
    %v958 = vadd.f32 %v203, %v956
    %v959 = vtanh.pop %v958
    %v960 = vsub.f32 1.0, %v948
    %962 = vrot.lane.b32.xlu0 %v959, 96
    %v963 = vpop.permute.xlu0 %962
    %v965 = vmul.f32 %v960, %v963
    %v966 = vmul.f32 %v948, %v863
    %v967 = vadd.f32 %v965, %v966
    %969 = vrot.lane.b32.xlu0 %v967, 96
    %v970 = vpop.permute.xlu0 %969
    %s972 = scalar_lea.vmem [#allocation8], 56
    %973 = vst.msk [vmem:[%s972] sm:$0xff] %vm244, %v970
    // Predicated region
    $region34: #{tpu_custom_call.1} parent=1 // pred_check
      _
    $region35: #{tpu_custom_call.1} parent=1 // pred_check_branch
      %975 = sbr.rel (0) target = $region37
    $region36: #{tpu_custom_call.1} parent=1 // pred_region
      %s977 = ssub.s32 1024, 1024
      %978 = vsyncadd [#allocation4], %s977
      %s979 = sshll.u32 [#allocation8], 4
      %s980 = int_to_ptr.vmem [resolvable:$true] %s979
      %985 = dma.vmem_to_hbm [thread:$0]  %s980, 1024, %s5, [#allocation4], 128, 128, 8
    $region37: #{tpu_custom_call.1} parent=1 // pred_fallthru
      _
    // Predicated region
    $region38: #{tpu_custom_call.1} parent=1 // pred_check
      _
    $region39: #{tpu_custom_call.1} parent=1 // pred_check_branch
      %987 = sbr.rel (0) target = $region41
    $region40: #{tpu_custom_call.1} parent=1 // pred_region
      %988 = dma.done [#allocation4], 1024
    $region41: #{tpu_custom_call.1} parent=1 // pred_fallthru
      _
    %989 = vsyncpa [#allocation3], 1
    %990 = vsyncpa [#allocation6], 1
    %991 = vsyncpa [#allocation4], 1

</llo_original>
